<compile_context>
chip_gen: v7x
topology: tpu7x:2x2x1
jax: 0.10.0
libtpu: 0.0.40
codegen_flags: <defaults>
</compile_context>

<pallas_src>
import jax
import jax.numpy as jnp
from jax.experimental import pallas as pl
from jax.experimental.pallas import tpu as pltpu


def mlp_kernel(xt_ref, w1_ref, b1_ref, w2_ref, b2_ref, w3_ref, b3_ref, o_ref):
    # xt_ref : (19, TB) bf16   feature-major batch tile (lanes = batch rows)
    # w1_ref : (32, 19) bf16   VMEM-resident across all grid steps
    # b1_ref : (32, 1)  f32    broadcast over lanes
    # w2_ref : (16, 32) bf16
    # b2_ref : (16, 1)  f32
    # w3_ref : (16, 1)  f32    used on the VPU (no MXU push for the last layer)
    # b3_ref : (1, 1)   f32    scalar in SMEM
    # o_ref  : (1, TB)  f32    lane-dense output row for this tile
    x = xt_ref[...]                                                    # (19, TB)

    h1 = jnp.dot(w1_ref[...], x, preferred_element_type=jnp.float32)  # (32, TB)
    h1 = jnp.maximum(h1 + b1_ref[...], 0.0).astype(jnp.bfloat16)

    h2 = jnp.dot(w2_ref[...], h1, preferred_element_type=jnp.float32)  # (16, TB)
    h2 = jnp.maximum(h2 + b2_ref[...], 0.0)                            # keep f32

    # Final (1,16) layer as a VPU weighted sum + sublane reduce (XLU):
    # avoids a third MXU push per tile and keeps full f32 precision.
    out = jnp.sum(h2 * w3_ref[...], axis=0, keepdims=True)             # (1, TB)
    o_ref[...] = (out + b3_ref[0, 0]).astype(o_ref.dtype)


def reference_forward(x, params):
    """Pure-JAX float32 reference (PyTorch eval semantics)."""
    w1, b1, w2, b2, w3, b3 = params
    h1 = jnp.maximum(x @ w1.T + b1, 0.0)
    h2 = jnp.maximum(h1 @ w2.T + b2, 0.0)
    return h2 @ w3.T + b3


def _round_up(n, m):
    return ((n + m - 1) // m) * m


def _batch_dim_semantics():
    # Only CORE_PARALLEL actually shards a grid axis across v7x's 2 TensorCores
    # ("parallel" vs "arbitrary" is codegen-neutral).  Gate it on the device
    # kind so single-TC generations keep the known-good path.
    try:
        kind = jax.devices()[0].device_kind.lower()
    except Exception:
        kind = ""
    if "v7" in kind and hasattr(pltpu, "CORE_PARALLEL"):
        return (pltpu.CORE_PARALLEL,)
    return ("parallel",)


def make_classifi_forward(params, *, block_b_target=32768, min_pallas_batch=2048):
    """Build the forward fn with kernel-ready operands pre-cast once.

    params: (w1 (32,19), b1 (32,), w2 (16,32), b2 (16,), w3 (1,16), b3 (1,)) f32.
    Returns forward(x: (B,19) f32) -> (B,1) f32.
    """
    w1, b1, w2, b2, w3, b3 = params
    # Pre-cast / re-layout ONCE (hoisted out of the per-call wrapper).
    w1b = w1.astype(jnp.bfloat16)                 # (32, 19)
    w2b = w2.astype(jnp.bfloat16)                 # (16, 32)
    b1c = b1.reshape(32, 1).astype(jnp.float32)
    b2c = b2.reshape(16, 1).astype(jnp.float32)
    w3c = w3.reshape(16, 1).astype(jnp.float32)   # column for the VPU final layer
    b3c = b3.reshape(1, 1).astype(jnp.float32)
    dim_sem = _batch_dim_semantics()

    def forward(x):
        B, F = x.shape
        assert F == 19, F

        # Tiny batches: a Pallas launch + weight DMA setup costs several us;
        # plain XLA is strictly faster there.
        if B < min_pallas_batch:
            return reference_forward(x, params)

        tb = min(block_b_target, _round_up(B, 128))   # multiple of 128
        num_tiles = pl.cdiv(B, tb)

        # Single fused HBM pass: transpose to feature-major + cast to bf16.
        xt = x.T.astype(jnp.bfloat16)                 # (19, B), lane-dense tiles

        out_row = pl.pallas_call(
            mlp_kernel,
            out_shape=jax.ShapeDtypeStruct((1, B), jnp.float32),
            grid_spec=pltpu.PrefetchScalarGridSpec(
                num_scalar_prefetch=0,
                grid=(num_tiles,),
                in_specs=[
                    pl.BlockSpec((19, tb), lambda i: (0, i)),   # x: streamed tiles
                    pl.BlockSpec((32, 19), lambda i: (0, 0)),   # w1: resident
                    pl.BlockSpec((32, 1), lambda i: (0, 0)),    # b1: resident
                    pl.BlockSpec((16, 32), lambda i: (0, 0)),   # w2: resident
                    pl.BlockSpec((16, 1), lambda i: (0, 0)),    # b2: resident
                    pl.BlockSpec((16, 1), lambda i: (0, 0)),    # w3: resident
                    pl.BlockSpec((1, 1), lambda i: (0, 0),
                                 memory_space=pltpu.MemorySpace.SMEM),  # b3
                ],
                out_specs=pl.BlockSpec((1, tb), lambda i: (0, i)),
            ),
            compiler_params=pltpu.CompilerParams(
                dimension_semantics=dim_sem,
            ),
        )(xt, w1b, b1c, w2b, b2c, w3c, b3c)

        return out_row.reshape(B, 1)

    return forward


def init_params(key):
    """Deterministic init matching nn.Linear layouts: w (out,in), b (out,)."""
    ks = jax.random.split(key, 6)

    def linear(kw, kb, fan_in, fan_out):
        bound = fan_in ** -0.5
        w = jax.random.uniform(kw, (fan_out, fan_in), jnp.float32, -bound, bound)
        b = jax.random.uniform(kb, (fan_out,), jnp.float32, -bound, bound)
        return w, b

    w1, b1 = linear(ks[0], ks[1], 19, 32)
    w2, b2 = linear(ks[2], ks[3], 32, 16)
    w3, b3 = linear(ks[4], ks[5], 16, 1)
    return (w1, b1, w2, b2, w3, b3)


if __name__ == "__main__":
    key = jax.random.PRNGKey(0)
    k_x, k_p = jax.random.split(key)

    # Smoke-test shape: small, and deliberately NOT a multiple of the tile so
    # the ragged final block (masked write) and a multi-step batch grid are
    # exercised.  Production default tile is 32768; we shrink it here only to
    # get >1 grid step at this small batch.
    B = 4000
    x = jax.random.normal(k_x, (B, 19), dtype=jnp.float32)
    params = init_params(k_p)

    forward = jax.jit(
        make_classifi_forward(params, block_b_target=1024, min_pallas_batch=1024))
    out = jax.block_until_ready(forward(x))

    ref = reference_forward(x, params)
    assert out.shape == (B, 1), out.shape
    # bf16 operands in layers 1-2 vs f32 reference -> relaxed tolerance.
    assert jnp.allclose(out, ref, atol=5e-2, rtol=5e-2), (
        float(jnp.max(jnp.abs(out - ref))))

    print("KERNEL_OK")
</pallas_src>

<mosaic_0001>
module attributes {stable_mosaic.version = 11 : i64} {
  func.func @mlp_kernel(%arg0: i32, %arg1: memref<19x1024xbf16, #tpu.memory_space<vmem>>, %arg2: memref<32x19xbf16, #tpu.memory_space<vmem>>, %arg3: memref<32x1xf32, #tpu.memory_space<vmem>>, %arg4: memref<16x32xbf16, #tpu.memory_space<vmem>>, %arg5: memref<16x1xf32, #tpu.memory_space<vmem>>, %arg6: memref<16x1xf32, #tpu.memory_space<vmem>>, %arg7: memref<1x1xf32, #tpu.memory_space<smem>>, %arg8: memref<1x1024xf32, #tpu.memory_space<vmem>>) attributes {dimension_semantics = [#tpu.dimension_semantics<parallel>], iteration_bounds = array<i64: 4>, scalar_prefetch = 0 : i64, scratch_operands = 0 : i64, tpu.core_type = #tpu.core_type<tc>, window_params = [{transform_indices = @transform_0, window_bounds = array<i64: 19, 1024>}, {pipeline_mode = #tpu.pipeline_mode<synchronous>, transform_indices = @transform_1, window_bounds = array<i64: 32, 19>}, {pipeline_mode = #tpu.pipeline_mode<synchronous>, transform_indices = @transform_2, window_bounds = array<i64: 32, 1>}, {pipeline_mode = #tpu.pipeline_mode<synchronous>, transform_indices = @transform_3, window_bounds = array<i64: 16, 32>}, {pipeline_mode = #tpu.pipeline_mode<synchronous>, transform_indices = @transform_4, window_bounds = array<i64: 16, 1>}, {pipeline_mode = #tpu.pipeline_mode<synchronous>, transform_indices = @transform_5, window_bounds = array<i64: 16, 1>}, {transform_indices = @transform_6, window_bounds = array<i64: 1, 1>}, {transform_indices = @transform_7, window_bounds = array<i64: 1, 1024>}]} {
    %c0 = arith.constant 0 : index
    %c0_0 = arith.constant 0 : index
    %0 = vector.load %arg1[%c0, %c0_0] : memref<19x1024xbf16, #tpu.memory_space<vmem>>, vector<19x1024xbf16>
    %c0_1 = arith.constant 0 : index
    %c0_2 = arith.constant 0 : index
    %1 = vector.load %arg2[%c0_1, %c0_2] : memref<32x19xbf16, #tpu.memory_space<vmem>>, vector<32x19xbf16>
    %cst = arith.constant dense<0.000000e+00> : vector<32x1024xf32>
    %2 = tpu.matmul %1, %0, %cst {dimension_numbers = #tpu.dot_dimension_numbers<[1], [0], [0], [1], [0, 0, 1, 1], [], []>} : vector<32x19xbf16>, vector<19x1024xbf16>, vector<32x1024xf32> -> vector<32x1024xf32>
    %c0_3 = arith.constant 0 : index
    %c0_4 = arith.constant 0 : index
    %3 = vector.load %arg3[%c0_3, %c0_4] : memref<32x1xf32, #tpu.memory_space<vmem>>, vector<32x1xf32>
    %4 = vector.broadcast %3 : vector<32x1xf32> to vector<32x1024xf32>
    %5 = arith.addf %2, %4 : vector<32x1024xf32>
    %cst_5 = arith.constant 0.000000e+00 : f32
    %6 = vector.broadcast %cst_5 : f32 to vector<32x1024xf32>
    %7 = arith.maximumf %5, %6 : vector<32x1024xf32>
    %8 = arith.truncf %7 : vector<32x1024xf32> to vector<32x1024xbf16>
    %c0_6 = arith.constant 0 : index
    %c0_7 = arith.constant 0 : index
    %9 = vector.load %arg4[%c0_6, %c0_7] : memref<16x32xbf16, #tpu.memory_space<vmem>>, vector<16x32xbf16>
    %cst_8 = arith.constant dense<0.000000e+00> : vector<16x1024xf32>
    %10 = tpu.matmul %9, %8, %cst_8 {dimension_numbers = #tpu.dot_dimension_numbers<[1], [0], [0], [1], [0, 0, 1, 1], [], []>} : vector<16x32xbf16>, vector<32x1024xbf16>, vector<16x1024xf32> -> vector<16x1024xf32>
    %c0_9 = arith.constant 0 : index
    %c0_10 = arith.constant 0 : index
    %11 = vector.load %arg5[%c0_9, %c0_10] : memref<16x1xf32, #tpu.memory_space<vmem>>, vector<16x1xf32>
    %12 = vector.broadcast %11 : vector<16x1xf32> to vector<16x1024xf32>
    %13 = arith.addf %10, %12 : vector<16x1024xf32>
    %cst_11 = arith.constant 0.000000e+00 : f32
    %14 = vector.broadcast %cst_11 : f32 to vector<16x1024xf32>
    %15 = arith.maximumf %13, %14 : vector<16x1024xf32>
    %c0_12 = arith.constant 0 : index
    %c0_13 = arith.constant 0 : index
    %16 = vector.load %arg6[%c0_12, %c0_13] : memref<16x1xf32, #tpu.memory_space<vmem>>, vector<16x1xf32>
    %17 = vector.broadcast %16 : vector<16x1xf32> to vector<16x1024xf32>
    %18 = arith.mulf %15, %17 : vector<16x1024xf32>
    %cst_14 = arith.constant dense<0.000000e+00> : vector<1024xf32>
    %19 = vector.multi_reduction <add>, %18, %cst_14 [0] : vector<16x1024xf32> to vector<1024xf32>
    %20 = vector.shape_cast %19 : vector<1024xf32> to vector<1x1024xf32>
    %c0_15 = arith.constant 0 : index
    %c0_16 = arith.constant 0 : index
    %21 = memref.load %arg7[%c0_15, %c0_16] : memref<1x1xf32, #tpu.memory_space<smem>>
    %22 = vector.broadcast %21 : f32 to vector<1x1024xf32>
    %23 = arith.addf %20, %22 : vector<1x1024xf32>
    %c0_17 = arith.constant 0 : index
    %c0_18 = arith.constant 0 : index
    %24 = vector.load %arg8[%c0_17, %c0_18] : memref<1x1024xf32, #tpu.memory_space<vmem>>, vector<1x1024xf32>
    tpu.vector_store %arg8[%c0_17, %c0_18], %23 {strides = array<i32>} : memref<1x1024xf32, #tpu.memory_space<vmem>>, vector<1x1024xf32>,
    return
  }
  func.func @transform_0(%arg0: i32) -> (i32, i32) {
    %c0_i32 = arith.constant 0 : i32
    %c0_i32_0 = arith.constant 0 : i32
    return %c0_i32, %arg0 : i32, i32
  }
  func.func @transform_1(%arg0: i32) -> (i32, i32) {
    %c0_i32 = arith.constant 0 : i32
    %c0_i32_0 = arith.constant 0 : i32
    %c0_i32_1 = arith.constant 0 : i32
    return %c0_i32, %c0_i32_0 : i32, i32
  }
  func.func @transform_2(%arg0: i32) -> (i32, i32) {
    %c0_i32 = arith.constant 0 : i32
    %c0_i32_0 = arith.constant 0 : i32
    %c0_i32_1 = arith.constant 0 : i32
    return %c0_i32, %c0_i32_0 : i32, i32
  }
  func.func @transform_3(%arg0: i32) -> (i32, i32) {
    %c0_i32 = arith.constant 0 : i32
    %c0_i32_0 = arith.constant 0 : i32
    %c0_i32_1 = arith.constant 0 : i32
    return %c0_i32, %c0_i32_0 : i32, i32
  }
  func.func @transform_4(%arg0: i32) -> (i32, i32) {
    %c0_i32 = arith.constant 0 : i32
    %c0_i32_0 = arith.constant 0 : i32
    %c0_i32_1 = arith.constant 0 : i32
    return %c0_i32, %c0_i32_0 : i32, i32
  }
  func.func @transform_5(%arg0: i32) -> (i32, i32) {
    %c0_i32 = arith.constant 0 : i32
    %c0_i32_0 = arith.constant 0 : i32
    %c0_i32_1 = arith.constant 0 : i32
    return %c0_i32, %c0_i32_0 : i32, i32
  }
  func.func @transform_6(%arg0: i32) -> (i32, i32) {
    %c0_i32 = arith.constant 0 : i32
    %c0_i32_0 = arith.constant 0 : i32
    %c0_i32_1 = arith.constant 0 : i32
    return %c0_i32, %c0_i32_0 : i32, i32
  }
  func.func @transform_7(%arg0: i32) -> (i32, i32) {
    %c0_i32 = arith.constant 0 : i32
    %c0_i32_0 = arith.constant 0 : i32
    return %c0_i32, %arg0 : i32, i32
  }
}

</mosaic_0001>

<llo_original>
// kernel: forward.1
$region0: #{forward.1}
  #allocation0 [shape = 'u32[]', space=smem, size = 0x4, offset = 0x4, fixed_abs, tag = 'smem constant byte address 0x4 - core index']
  #allocation1 [shape = 'u32[144,128]{1,0:T(1,128)}', space=vmem, size = 0x12000, scoped, tag = 'internal scratch']
  #allocation2 [shape = 'f32[1,1]{1,0:T(1,128)S(6)}', space=smem, size = 0x200, scoped, tag = 'scoped memory for forward.1']
  %s0 = inlined_call_operand.vmem [shape: bf16[19,4000], index: 0, kind: input, shape index: {}]
  %s1 = inlined_call_operand.vmem [shape: bf16[32,19], index: 1, kind: input, shape index: {}]
  %s2 = inlined_call_operand.vmem [shape: f32[32,1], index: 2, kind: input, shape index: {}]
  %s3 = inlined_call_operand.vmem [shape: bf16[16,32], index: 3, kind: input, shape index: {}]
  %s4 = inlined_call_operand.vmem [shape: f32[16,1], index: 4, kind: input, shape index: {}]
  %s5 = inlined_call_operand.vmem [shape: f32[16,1], index: 5, kind: input, shape index: {}]
  %s6 = inlined_call_operand.<no memory space> [shape: f32[1,1], index: 6, kind: input, shape index: {}]
  %s7 = inlined_call_operand.hbm [shape: f32[1,4000], index: 7, kind: output, shape index: {}]
  %s8 = sld [smem:[#allocation0]]
  $region84: #{forward.1} parent=0
    _
  %s10 = ssub.s32 1, %s8
  %s11 = scalar_select 0, %s10, %s8
  %12 = sst [smem:[#allocation2]] %s6
  $region1: #{forward.1} parent=0
    #allocation3 [shape = 'u8[98304]{0}', space=vmem, size = 0x18000, scoped, tag = 'input window, operand 0']
    #allocation4 [shape = 'u8[8192]{0}', space=vmem, size = 0x2000, scoped, tag = 'output window, operand 0']
    #allocation5 [shape = 's32[2]{0}', space=sflag, size = 0x8, scoped, tag = 'scoped memory for forward.1']
    %13 = vsyncpa [#allocation5], 0
    %s14 = scalar_lea.sflag [#allocation5], 1
    %15 = vsyncpa %s14, 0
    loop: start=0, step=1, limit=6
    $region2: #{forward.1} parent=1 // loop_pre_header
      _
    $region3: #{forward.1} parent=1 // loop_header
      %s17 = sphi 0, %s21
      %p18 = scmp.ge.s32.totalorder %s17, 6
      %s27 = sphi 0, %s29
      %s30 = sphi 0, %s27
      %s31 = sphi 0, %s30
      %s47 = sphi 0, %s31
      %s51 = sphi 0, %s51
      %s53 = sphi 0, %s51
      %s54 = sphi 0, %s53
      %s68 = sphi 0, %s54
      %s72 = sphi 0, %s72
      %s74 = sphi 0, %s72
      %s75 = sphi 0, %s74
      %s89 = sphi 0, %s75
      %s93 = sphi 0, %s93
      %s95 = sphi 0, %s93
      %s96 = sphi 0, %s95
      %s110 = sphi 0, %s96
      %s114 = sphi 0, %s114
      %s116 = sphi 0, %s114
      %s117 = sphi 0, %s116
      %s131 = sphi 0, %s117
      %s135 = sphi 0, %s135
      %s137 = sphi 0, %s135
      %s138 = sphi 0, %s137
      %s152 = sphi 0, %s138
      %s156 = sphi 0, %s156
      %s158 = sphi 0, %s156
      %s159 = sphi 0, %s158
      %s173 = sphi 0, %s159
      %s179 = sphi 0, %s181
      %s182 = sphi 0, %s179
      %s183 = sphi 0, %s182
      %s199 = sphi 0, %s183
    $region4: #{forward.1} parent=1 // loop_header_branch
      %20 = sbr.rel (%p18) target = $region8
    $region5: #{forward.1} parent=1 // loop_body
      %s22 = ssub.s32 %s17, 1
      %s23 = ssub.s32 %s17, 2
      %s24 = sadd.s32 %s17, 1
      %s25 = ssub.s32 %s17, %s24
      %p26 = scmp.eq.s32.totalorder %s25, 0
      %s28 = sadd.s32 %s27, 1
      %s29 = scalar_select %p26, %s27, %s28
      %p32 = pneg %p26
      %p33 = scmp.eq.s32.totalorder %s17, 3
      %p34 = por %p32, %p33
      %p35 = scmp.ne.s32.totalorder %s27, %s30
      %p36 = scmp.eq.s32.totalorder %s17, 0
      %p37 = por %p35, %p36
      %p38 = scmp.ne.s32.totalorder %s27, %s30
      %p39 = scmp.eq.s32.totalorder %s22, 3
      %p40 = por %p38, %p39
      %p41 = scmp.ne.s32.totalorder %s30, %s31
      %p42 = scmp.eq.s32.totalorder %s22, 0
      %p43 = por %p41, %p42
      %p44 = scmp.ne.s32.totalorder %s30, %s31
      %p45 = scmp.eq.s32.totalorder %s23, 3
      %p46 = por %p44, %p45
      %p48 = scmp.ne.s32.totalorder %s31, %s47
      %p49 = scmp.eq.s32.totalorder %s23, 0
      %p50 = por %p48, %p49
      %s52 = sadd.s32 %s51, 1
      %p55 = scmp.eq.s32.totalorder %s17, 3
      %p56 = scmp.ne.s32.totalorder %s51, %s53
      %p57 = scmp.eq.s32.totalorder %s17, 0
      %p58 = por %p56, %p57
      %p59 = scmp.ne.s32.totalorder %s51, %s53
      %p60 = scmp.eq.s32.totalorder %s22, 3
      %p61 = por %p59, %p60
      %p62 = scmp.ne.s32.totalorder %s53, %s54
      %p63 = scmp.eq.s32.totalorder %s22, 0
      %p64 = por %p62, %p63
      %p65 = scmp.ne.s32.totalorder %s53, %s54
      %p66 = scmp.eq.s32.totalorder %s23, 3
      %p67 = por %p65, %p66
      %p69 = scmp.ne.s32.totalorder %s54, %s68
      %p70 = scmp.eq.s32.totalorder %s23, 0
      %p71 = por %p69, %p70
      %s73 = sadd.s32 %s72, 1
      %p76 = scmp.eq.s32.totalorder %s17, 3
      %p77 = scmp.ne.s32.totalorder %s72, %s74
      %p78 = scmp.eq.s32.totalorder %s17, 0
      %p79 = por %p77, %p78
      %p80 = scmp.ne.s32.totalorder %s72, %s74
      %p81 = scmp.eq.s32.totalorder %s22, 3
      %p82 = por %p80, %p81
      %p83 = scmp.ne.s32.totalorder %s74, %s75
      %p84 = scmp.eq.s32.totalorder %s22, 0
      %p85 = por %p83, %p84
      %p86 = scmp.ne.s32.totalorder %s74, %s75
      %p87 = scmp.eq.s32.totalorder %s23, 3
      %p88 = por %p86, %p87
      %p90 = scmp.ne.s32.totalorder %s75, %s89
      %p91 = scmp.eq.s32.totalorder %s23, 0
      %p92 = por %p90, %p91
      %s94 = sadd.s32 %s93, 1
      %p97 = scmp.eq.s32.totalorder %s17, 3
      %p98 = scmp.ne.s32.totalorder %s93, %s95
      %p99 = scmp.eq.s32.totalorder %s17, 0
      %p100 = por %p98, %p99
      %p101 = scmp.ne.s32.totalorder %s93, %s95
      %p102 = scmp.eq.s32.totalorder %s22, 3
      %p103 = por %p101, %p102
      %p104 = scmp.ne.s32.totalorder %s95, %s96
      %p105 = scmp.eq.s32.totalorder %s22, 0
      %p106 = por %p104, %p105
      %p107 = scmp.ne.s32.totalorder %s95, %s96
      %p108 = scmp.eq.s32.totalorder %s23, 3
      %p109 = por %p107, %p108
      %p111 = scmp.ne.s32.totalorder %s96, %s110
      %p112 = scmp.eq.s32.totalorder %s23, 0
      %p113 = por %p111, %p112
      %s115 = sadd.s32 %s114, 1
      %p118 = scmp.eq.s32.totalorder %s17, 3
      %p119 = scmp.ne.s32.totalorder %s114, %s116
      %p120 = scmp.eq.s32.totalorder %s17, 0
      %p121 = por %p119, %p120
      %p122 = scmp.ne.s32.totalorder %s114, %s116
      %p123 = scmp.eq.s32.totalorder %s22, 3
      %p124 = por %p122, %p123
      %p125 = scmp.ne.s32.totalorder %s116, %s117
      %p126 = scmp.eq.s32.totalorder %s22, 0
      %p127 = por %p125, %p126
      %p128 = scmp.ne.s32.totalorder %s116, %s117
      %p129 = scmp.eq.s32.totalorder %s23, 3
      %p130 = por %p128, %p129
      %p132 = scmp.ne.s32.totalorder %s117, %s131
      %p133 = scmp.eq.s32.totalorder %s23, 0
      %p134 = por %p132, %p133
      %s136 = sadd.s32 %s135, 1
      %p139 = scmp.eq.s32.totalorder %s17, 3
      %p140 = scmp.ne.s32.totalorder %s135, %s137
      %p141 = scmp.eq.s32.totalorder %s17, 0
      %p142 = por %p140, %p141
      %p143 = scmp.ne.s32.totalorder %s135, %s137
      %p144 = scmp.eq.s32.totalorder %s22, 3
      %p145 = por %p143, %p144
      %p146 = scmp.ne.s32.totalorder %s137, %s138
      %p147 = scmp.eq.s32.totalorder %s22, 0
      %p148 = por %p146, %p147
      %p149 = scmp.ne.s32.totalorder %s137, %s138
      %p150 = scmp.eq.s32.totalorder %s23, 3
      %p151 = por %p149, %p150
      %p153 = scmp.ne.s32.totalorder %s138, %s152
      %p154 = scmp.eq.s32.totalorder %s23, 0
      %p155 = por %p153, %p154
      %s157 = sadd.s32 %s156, 1
      %p160 = scmp.eq.s32.totalorder %s17, 3
      %p161 = scmp.ne.s32.totalorder %s156, %s158
      %p162 = scmp.eq.s32.totalorder %s17, 0
      %p163 = por %p161, %p162
      %p164 = scmp.ne.s32.totalorder %s156, %s158
      %p165 = scmp.eq.s32.totalorder %s22, 3
      %p166 = por %p164, %p165
      %p167 = scmp.ne.s32.totalorder %s158, %s159
      %p168 = scmp.eq.s32.totalorder %s22, 0
      %p169 = por %p167, %p168
      %p170 = scmp.ne.s32.totalorder %s158, %s159
      %p171 = scmp.eq.s32.totalorder %s23, 3
      %p172 = por %p170, %p171
      %p174 = scmp.ne.s32.totalorder %s159, %s173
      %p175 = scmp.eq.s32.totalorder %s23, 0
      %p176 = por %p174, %p175
      %s177 = ssub.s32 %s17, %s24
      %p178 = scmp.eq.s32.totalorder %s177, 0
      %s180 = sadd.s32 %s179, 1
      %s181 = scalar_select %p178, %s179, %s180
      %p184 = pneg %p178
      %p185 = scmp.eq.s32.totalorder %s17, 3
      %p186 = por %p184, %p185
      %p187 = scmp.ne.s32.totalorder %s179, %s182
      %p188 = scmp.eq.s32.totalorder %s17, 0
      %p189 = por %p187, %p188
      %p190 = scmp.ne.s32.totalorder %s179, %s182
      %p191 = scmp.eq.s32.totalorder %s22, 3
      %p192 = por %p190, %p191
      %p193 = scmp.ne.s32.totalorder %s182, %s183
      %p194 = scmp.eq.s32.totalorder %s22, 0
      %p195 = por %p193, %p194
      %p196 = scmp.ne.s32.totalorder %s182, %s183
      %p197 = scmp.eq.s32.totalorder %s23, 3
      %p198 = por %p196, %p197
      %p200 = scmp.ne.s32.totalorder %s183, %s199
      %p201 = scmp.eq.s32.totalorder %s23, 0
      %p202 = por %p200, %p201
      %p203 = scmp.le.s32.totalorder 1, %s17
      %p204 = scmp.lt.s32.totalorder %s17, 5
      %p205 = pnand %p203, %p204
      %p206 = pneg %p205
      // Predicated region
      $region9: #{forward.1} parent=5 // pred_check
        _
      $region10: #{forward.1} parent=5 // pred_check_branch
        %208 = sbr.rel (%p205) target = $region12
      $region11: #{forward.1} parent=5 // pred_region
        %s209 = ssub.s32 %s17, 1
        // Predicated region
        $region13: #{forward.1} parent=11 // pred_check
          %p210 = pneg %p64
        $region14: #{forward.1} parent=11 // pred_check_branch
          %212 = sbr.rel (%p210) target = $region16
        $region15: #{forward.1} parent=11 // pred_region
          _
        $region16: #{forward.1} parent=11 // pred_fallthru
          _
        // Predicated region
        $region17: #{forward.1} parent=11 // pred_check
          %p213 = pneg %p85
        $region18: #{forward.1} parent=11 // pred_check_branch
          %215 = sbr.rel (%p213) target = $region20
        $region19: #{forward.1} parent=11 // pred_region
          _
        $region20: #{forward.1} parent=11 // pred_fallthru
          _
        // Predicated region
        $region21: #{forward.1} parent=11 // pred_check
          %p216 = pneg %p106
        $region22: #{forward.1} parent=11 // pred_check_branch
          %218 = sbr.rel (%p216) target = $region24
        $region23: #{forward.1} parent=11 // pred_region
          _
        $region24: #{forward.1} parent=11 // pred_fallthru
          _
        // Predicated region
        $region25: #{forward.1} parent=11 // pred_check
          %p219 = pneg %p127
        $region26: #{forward.1} parent=11 // pred_check_branch
          %221 = sbr.rel (%p219) target = $region28
        $region27: #{forward.1} parent=11 // pred_region
          _
        $region28: #{forward.1} parent=11 // pred_fallthru
          _
        // Predicated region
        $region29: #{forward.1} parent=11 // pred_check
          %p222 = pneg %p148
        $region30: #{forward.1} parent=11 // pred_check_branch
          %224 = sbr.rel (%p222) target = $region32
        $region31: #{forward.1} parent=11 // pred_region
          _
        $region32: #{forward.1} parent=11 // pred_fallthru
          _
        // Predicated region
        $region33: #{forward.1} parent=11 // pred_check
          %p225 = pneg %p169
        $region34: #{forward.1} parent=11 // pred_check_branch
          %227 = sbr.rel (%p225) target = $region36
        $region35: #{forward.1} parent=11 // pred_region
          _
        $region36: #{forward.1} parent=11 // pred_fallthru
          _
      $region12: #{forward.1} parent=5 // pred_fallthru
        _
      %p228 = scmp.lt.s32.totalorder %s17, 4
      // Predicated region
      $region37: #{forward.1} parent=5 // pred_check
        %p229 = pneg %p228
      $region38: #{forward.1} parent=5 // pred_check_branch
        %231 = sbr.rel (%p229) target = $region40
      $region39: #{forward.1} parent=5 // pred_region
        // Predicated region
        $region41: #{forward.1} parent=39 // pred_check
          %p232 = pneg %p37
        $region42: #{forward.1} parent=39 // pred_check_branch
          %234 = sbr.rel (%p232) target = $region44
        $region43: #{forward.1} parent=39 // pred_region
          %s235 = sand.u32 %s27, 1
          %s236 = sand.u32 %s27, 1
          %s237 = smul.addr %s236, 96
          %s238 = scalar_lea.vmem [#allocation3], %s237
          %s239 = smul.u32 8, %s17
          %s240 = smul.addr %s239, 4
          %s241 = scalar_lea.vmem %s0, %s240
          // Predicated region
          $region45: #{forward.1} parent=43 // pred_check
            _
          $region46: #{forward.1} parent=43 // pred_check_branch
            %243 = sbr.rel (0) target = $region48
          $region47: #{forward.1} parent=43 // pred_region
            // Predicated region
            $region49: #{forward.1} parent=47 // pred_check
              _
            $region50: #{forward.1} parent=47 // pred_check_branch
              %245 = sbr.rel (0) target = $region52
            $region51: #{forward.1} parent=47 // pred_region
              loop: start=0, step=1, limit=1
              $region53: #{forward.1} parent=51 // loop_pre_header
                _
              $region54: #{forward.1} parent=51 // loop_header
                %s247 = sphi 0, %s251
                %p248 = scmp.ge.s32.totalorder %s247, 1
                %s252 = sphi %s241, %s241
                %s253 = sphi %s238, %s238
              $region55: #{forward.1} parent=51 // loop_header_branch
                %250 = sbr.rel (%p248) target = $region59
              $region56: #{forward.1} parent=51 // loop_body
                %v254 = vld [vmem:[%s252] sm:$0xff]
                %255 = vst [vmem:[%s253] sm:$0xff] %v254
                %v256 = vld [vmem:[%s252 + $0x8] sm:$0xff]
                %257 = vst [vmem:[%s253 + $0x8] sm:$0xff] %v256
                %v258 = vld [vmem:[%s252 + $0x10] sm:$0xff]
                %259 = vst [vmem:[%s253 + $0x10] sm:$0xff] %v258
                %v260 = vld [vmem:[%s252 + $0x18] sm:$0xff]
                %261 = vst [vmem:[%s253 + $0x18] sm:$0xff] %v260
                %v262 = vld [vmem:[%s252 + $0x80] sm:$0xff]
                %263 = vst [vmem:[%s253 + $0x20] sm:$0xff] %v262
                %v264 = vld [vmem:[%s252 + $0x88] sm:$0xff]
                %265 = vst [vmem:[%s253 + $0x28] sm:$0xff] %v264
                %v266 = vld [vmem:[%s252 + $0x90] sm:$0xff]
                %267 = vst [vmem:[%s253 + $0x30] sm:$0xff] %v266
                %v268 = vld [vmem:[%s252 + $0x98] sm:$0xff]
                %269 = vst [vmem:[%s253 + $0x38] sm:$0xff] %v268
                %v270 = vld [vmem:[%s252 + $0x100] sm:$0xff]
                %271 = vst [vmem:[%s253 + $0x40] sm:$0xff] %v270
                %v272 = vld [vmem:[%s252 + $0x108] sm:$0xff]
                %273 = vst [vmem:[%s253 + $0x48] sm:$0xff] %v272
                %v274 = vld [vmem:[%s252 + $0x110] sm:$0xff]
                %275 = vst [vmem:[%s253 + $0x50] sm:$0xff] %v274
                %v276 = vld [vmem:[%s252 + $0x118] sm:$0xff]
                %277 = vst [vmem:[%s253 + $0x58] sm:$0xff] %v276
              $region57: #{forward.1} parent=51 // loop_footer
                %s251 = sadd.s32 1, %s247
              $region58: #{forward.1} parent=51 // loop_footer_branch
                %246 = sbr.rel target = $region54
              $region59: #{forward.1} parent=51 // loop_exit
                _
            $region52: #{forward.1} parent=47 // pred_fallthru
              _
            // Predicated region
            $region60: #{forward.1} parent=47 // pred_check
              _
            $region61: #{forward.1} parent=47 // pred_check_branch
              %279 = sbr.rel target = $region63
            $region62: #{forward.1} parent=47 // pred_region
              _
            $region63: #{forward.1} parent=47 // pred_fallthru
              _
          $region48: #{forward.1} parent=43 // pred_fallthru
            _
          %280 = vnop
        $region44: #{forward.1} parent=39 // pred_fallthru
          _
      $region40: #{forward.1} parent=5 // pred_fallthru
        _
      %p281 = scmp.le.s32.totalorder 1, %s17
      %p282 = scmp.lt.s32.totalorder %s17, 5
      %p283 = pnand %p281, %p282
      %p284 = pneg %p283
      // Predicated region
      $region64: #{forward.1} parent=5 // pred_check
        _
      $region65: #{forward.1} parent=5 // pred_check_branch
        %286 = sbr.rel (%p283) target = $region67
      $region66: #{forward.1} parent=5 // pred_region
        %s287 = ssub.s32 %s17, 1
        %s288 = sand.u32 %s30, 1
        %s289 = sand.u32 %s30, 1
        %s290 = smul.addr %s289, 96
        %s291 = scalar_lea.vmem [#allocation3], %s290
        // Predicated region
        $region68: #{forward.1} parent=66 // pred_check
          %p292 = pneg %p43
        $region69: #{forward.1} parent=66 // pred_check_branch
          %294 = sbr.rel (%p292) target = $region71
        $region70: #{forward.1} parent=66 // pred_region
          _
        $region71: #{forward.1} parent=66 // pred_fallthru
          _
        %s295 = sand.u32 %s30, 1
        %s296 = sand.u32 %s30, 1
        %s297 = smul.addr %s296, 96
        %s298 = scalar_lea.vmem [#allocation3], %s297
        %p299 = pneg %p43
        %p300 = pneg %p40
        %p301 = pneg %p64
        %p302 = pneg %p61
        %p303 = pneg %p85
        %p304 = pneg %p82
        %p305 = pneg %p106
        %p306 = pneg %p103
        %p307 = pneg %p127
        %p308 = pneg %p124
        %p309 = pneg %p148
        %p310 = pneg %p145
        %p311 = pneg %p169
        %p312 = pneg %p166
        %p313 = pneg %p195
        %p314 = pneg %p192
        %s315 = sand.u32 %s182, 1
        %s316 = scalar_lea.sflag [#allocation5], %s315
        %s317 = sand.u32 %s182, 1
        %s318 = smul.addr %s317, 8
        %s319 = scalar_lea.vmem [#allocation4], %s318
        %s320 = smul.u32 8, %s22
        %s321 = smul.u32 8, %s22
        %v323 = vld [vmem:[%s291] sm:$0xff]
        %v324 = vld [vmem:[%s291 + $0x8] sm:$0xff]
        %v325 = vld [vmem:[%s291 + $0x10] sm:$0xff]
        %v326 = vld [vmem:[%s291 + $0x18] sm:$0xff]
        %v327 = vld [vmem:[%s291 + $0x20] sm:$0xff]
        %v328 = vld [vmem:[%s291 + $0x28] sm:$0xff]
        %v329 = vld [vmem:[%s291 + $0x30] sm:$0xff]
        %v330 = vld [vmem:[%s291 + $0x38] sm:$0xff]
        %v331 = vld [vmem:[%s291 + $0x40] sm:$0x33]
        %v332 = vld [vmem:[%s291 + $0x48] sm:$0x33]
        %v333 = vld [vmem:[%s291 + $0x50] sm:$0x33]
        %v334 = vld [vmem:[%s291 + $0x58] sm:$0x33]
        %v335 = vld [vmem:[%s1] sm:$0xf]
        %v336 = vld [vmem:[%s1 + $0x4] sm:$0xf]
        %v337 = vld [vmem:[%s1 + $0x8] sm:$0xf]
        %v338 = vld [vmem:[%s1 + $0xc] sm:$0xf]
        %v339 = vld [vmem:[%s2] sm:$0xff]
        %v340 = vld [vmem:[%s2 + $0x8] sm:$0xff]
        %v341 = vld [vmem:[%s2 + $0x10] sm:$0xff]
        %v342 = vld [vmem:[%s2 + $0x18] sm:$0xff]
        %344 = vset.pattern.permute.xlu0 0
        %345 = vperm.xlu0 %344, %v339
        %v346 = vpop.permute.xlu0 %345
        %349 = vset.pattern.permute.xlu0 0
        %350 = vperm.xlu0 %349, %v340
        %v351 = vpop.permute.xlu0 %350
        %354 = vset.pattern.permute.xlu0 0
        %355 = vperm.xlu0 %354, %v341
        %v356 = vpop.permute.xlu0 %355
        %359 = vset.pattern.permute.xlu0 0
        %360 = vperm.xlu0 %359, %v342
        %v361 = vpop.permute.xlu0 %360
        %v367 = vunpack.c.l.b16 %v335
        %v368 = vunpack.c.l.b16 %v336
        %v369 = vunpack.c.l.b16 %v337
        %v370 = vunpack.c.l.b16 %v338
        %v371 = vpack.c.b16 %v368, %v367
        %v372 = vpack.c.b16 %v370, %v369
        %v385 = vunpack.c.l.b16 %v323
        %v386 = vunpack.c.h.b16 %v323
        %v387 = vunpack.c.l.b16 %v324
        %v388 = vunpack.c.h.b16 %v324
        %v389 = vunpack.c.l.b16 %v325
        %v390 = vunpack.c.h.b16 %v325
        %v391 = vunpack.c.l.b16 %v326
        %v392 = vunpack.c.h.b16 %v326
        %v393 = vunpack.c.l.b16 %v327
        %v394 = vunpack.c.h.b16 %v327
        %v395 = vunpack.c.l.b16 %v328
        %v396 = vunpack.c.h.b16 %v328
        %v397 = vunpack.c.l.b16 %v329
        %v398 = vunpack.c.h.b16 %v329
        %v399 = vunpack.c.l.b16 %v330
        %v400 = vunpack.c.h.b16 %v330
        %v401 = vunpack.c.l.b16 %v331
        %v402 = vunpack.c.h.b16 %v331
        %v403 = vunpack.c.l.b16 %v332
        %v404 = vunpack.c.h.b16 %v332
        %v405 = vunpack.c.l.b16 %v333
        %v406 = vunpack.c.h.b16 %v333
        %v407 = vunpack.c.l.b16 %v334
        %v408 = vunpack.c.h.b16 %v334
        %v409 = vpack.c.b16 %v393, %v385
        %v410 = vpack.c.b16 %v394, %v386
        %v411 = vpack.c.b16 %v395, %v387
        %v412 = vpack.c.b16 %v396, %v388
        %v413 = vpack.c.b16 %v397, %v389
        %v414 = vpack.c.b16 %v398, %v390
        %v415 = vpack.c.b16 %v399, %v391
        %v416 = vpack.c.b16 %v400, %v392
        %v417 = vpack.c.b16 %v401, %v401
        %v418 = vpack.c.b16 %v402, %v402
        %v419 = vpack.c.b16 %v403, %v403
        %v420 = vpack.c.b16 %v404, %v404
        %v421 = vpack.c.b16 %v405, %v405
        %v422 = vpack.c.b16 %v406, %v406
        %v423 = vpack.c.b16 %v407, %v407
        %v424 = vpack.c.b16 %v408, %v408
        %vm433 = vcmask 154624
        %v435 = vsel %vm433, %v371, 0
        %v438 = vsel %vm433, %v372, 0
        %vm440 = vcmask 1040384
        %vm441 = vcmask 1041408
        %v442 = vsel %vm440, 4294967295, 65535
        %v443 = vsel %vm441, %v442, 0
        %v445 = vand.u32 %v417, %v443
        %v448 = vand.u32 %v418, %v443
        %v451 = vand.u32 %v419, %v443
        %v454 = vand.u32 %v420, %v443
        %v457 = vand.u32 %v421, %v443
        %v460 = vand.u32 %v422, %v443
        %v463 = vand.u32 %v423, %v443
        %v466 = vand.u32 %v424, %v443
        %468 = vmatprep.subr.bf16.mxu0 %v410
        %469 = vmatpush1.bf16.msra.mxu0 %v409
        %470 = vmatprep.subr.bf16.mxu0 %v448
        %471 = vmatpush1.bf16.msra.mxu0 %v445
        %472 = vmatprep.subr.bf16.mxu0 0
        %473 = vmatpush1.bf16.msra.mxu0 0
        %474 = vmatprep.subr.bf16.mxu0 0
        %475 = vmatpush1.bf16.msra.mxu0 0
        %476 = vmatprep.subr.bf16.mxu0 0
        %477 = vmatpush1.bf16.msra.mxu0 0
        %478 = vmatprep.subr.bf16.mxu0 0
        %479 = vmatpush1.bf16.msra.mxu0 0
        %480 = vmatprep.subr.bf16.mxu0 0
        %481 = vmatpush1.bf16.msra.mxu0 0
        %482 = vmatprep.subr.bf16.mxu0 0
        %483 = vmatpush1.bf16.msra.mxu0 0
        %484 = vmatprep.subr.bf16.mxu0 0
        %485 = vmatpush1.bf16.msra.mxu0 0
        %486 = vmatprep.subr.bf16.mxu0 0
        %487 = vmatpush1.bf16.msra.mxu0 0
        %488 = vmatprep.subr.bf16.mxu0 0
        %489 = vmatpush1.bf16.msra.mxu0 0
        %490 = vmatprep.subr.bf16.mxu0 0
        %491 = vmatpush1.bf16.msra.mxu0 0
        %492 = vmatprep.subr.bf16.mxu0 0
        %493 = vmatpush1.bf16.msra.mxu0 0
        %494 = vmatprep.subr.bf16.mxu0 0
        %495 = vmatpush1.bf16.msra.mxu0 0
        %496 = vmatprep.subr.bf16.mxu0 0
        %497 = vmatpush1.bf16.msra.mxu0 0
        %498 = vmatprep.subr.bf16.mxu0 0
        %499 = vmatpush1.bf16.msra.mxu0 0
        %500 = vmatprep.mubr.bf16.mxu0 0
        %501 = vmatmul.mubr.bf16.gmra.mrb[0].mxu0 %v435
        %v502 = vpop.f32.mrb[0].mxu0
        %v503 = vadd.f32 %v346, %v502
        %v504 = vpop.f32.mrb[0].mxu0
        %v505 = vadd.f32 %v346, %v504
        %v506 = vpop.f32.mrb[0].mxu0
        %v507 = vadd.f32 %v351, %v506
        %v508 = vpop.f32.mrb[0].mxu0
        %v509 = vadd.f32 %v351, %v508
        %510 = vmatprep.mubr.bf16.mxu0 0
        %511 = vmatmul.mubr.bf16.gmra.mrb[0].mxu0 %v438
        %v512 = vpop.f32.mrb[0].mxu0
        %v513 = vadd.f32 %v356, %v512
        %v514 = vpop.f32.mrb[0].mxu0
        %v515 = vadd.f32 %v356, %v514
        %v516 = vpop.f32.mrb[0].mxu0
        %v517 = vadd.f32 %v361, %v516
        %v518 = vpop.f32.mrb[0].mxu0
        %v519 = vadd.f32 %v361, %v518
        %520 = vdwg.mxu0
        %521 = vmatprep.subr.bf16.mxu0 %v412
        %522 = vmatpush1.bf16.msra.mxu0 %v411
        %523 = vmatprep.subr.bf16.mxu0 %v454
        %524 = vmatpush1.bf16.msra.mxu0 %v451
        %525 = vmatprep.subr.bf16.mxu0 0
        %526 = vmatpush1.bf16.msra.mxu0 0
        %527 = vmatprep.subr.bf16.mxu0 0
        %528 = vmatpush1.bf16.msra.mxu0 0
        %529 = vmatprep.subr.bf16.mxu0 0
        %530 = vmatpush1.bf16.msra.mxu0 0
        %531 = vmatprep.subr.bf16.mxu0 0
        %532 = vmatpush1.bf16.msra.mxu0 0
        %533 = vmatprep.subr.bf16.mxu0 0
        %534 = vmatpush1.bf16.msra.mxu0 0
        %535 = vmatprep.subr.bf16.mxu0 0
        %536 = vmatpush1.bf16.msra.mxu0 0
        %537 = vmatprep.subr.bf16.mxu0 0
        %538 = vmatpush1.bf16.msra.mxu0 0
        %539 = vmatprep.subr.bf16.mxu0 0
        %540 = vmatpush1.bf16.msra.mxu0 0
        %541 = vmatprep.subr.bf16.mxu0 0
        %542 = vmatpush1.bf16.msra.mxu0 0
        %543 = vmatprep.subr.bf16.mxu0 0
        %544 = vmatpush1.bf16.msra.mxu0 0
        %545 = vmatprep.subr.bf16.mxu0 0
        %546 = vmatpush1.bf16.msra.mxu0 0
        %547 = vmatprep.subr.bf16.mxu0 0
        %548 = vmatpush1.bf16.msra.mxu0 0
        %549 = vmatprep.subr.bf16.mxu0 0
        %550 = vmatpush1.bf16.msra.mxu0 0
        %551 = vmatprep.subr.bf16.mxu0 0
        %552 = vmatpush1.bf16.msra.mxu0 0
        %553 = vmatprep.mubr.bf16.mxu0 0
        %554 = vmatmul.mubr.bf16.gmra.mrb[0].mxu0 %v435
        %v555 = vpop.f32.mrb[0].mxu0
        %v556 = vadd.f32 %v346, %v555
        %v557 = vpop.f32.mrb[0].mxu0
        %v558 = vadd.f32 %v346, %v557
        %v559 = vpop.f32.mrb[0].mxu0
        %v560 = vadd.f32 %v351, %v559
        %v561 = vpop.f32.mrb[0].mxu0
        %v562 = vadd.f32 %v351, %v561
        %563 = vmatprep.mubr.bf16.mxu0 0
        %564 = vmatmul.mubr.bf16.gmra.mrb[0].mxu0 %v438
        %v565 = vpop.f32.mrb[0].mxu0
        %v566 = vadd.f32 %v356, %v565
        %v567 = vpop.f32.mrb[0].mxu0
        %v568 = vadd.f32 %v356, %v567
        %v569 = vpop.f32.mrb[0].mxu0
        %v570 = vadd.f32 %v361, %v569
        %v571 = vpop.f32.mrb[0].mxu0
        %v572 = vadd.f32 %v361, %v571
        %573 = vdwg.mxu0
        %574 = vmatprep.subr.bf16.mxu0 %v414
        %575 = vmatpush1.bf16.msra.mxu0 %v413
        %576 = vmatprep.subr.bf16.mxu0 %v460
        %577 = vmatpush1.bf16.msra.mxu0 %v457
        %578 = vmatprep.subr.bf16.mxu0 0
        %579 = vmatpush1.bf16.msra.mxu0 0
        %580 = vmatprep.subr.bf16.mxu0 0
        %581 = vmatpush1.bf16.msra.mxu0 0
        %582 = vmatprep.subr.bf16.mxu0 0
        %583 = vmatpush1.bf16.msra.mxu0 0
        %584 = vmatprep.subr.bf16.mxu0 0
        %585 = vmatpush1.bf16.msra.mxu0 0
        %586 = vmatprep.subr.bf16.mxu0 0
        %587 = vmatpush1.bf16.msra.mxu0 0
        %588 = vmatprep.subr.bf16.mxu0 0
        %589 = vmatpush1.bf16.msra.mxu0 0
        %590 = vmatprep.subr.bf16.mxu0 0
        %591 = vmatpush1.bf16.msra.mxu0 0
        %592 = vmatprep.subr.bf16.mxu0 0
        %593 = vmatpush1.bf16.msra.mxu0 0
        %594 = vmatprep.subr.bf16.mxu0 0
        %595 = vmatpush1.bf16.msra.mxu0 0
        %596 = vmatprep.subr.bf16.mxu0 0
        %597 = vmatpush1.bf16.msra.mxu0 0
        %598 = vmatprep.subr.bf16.mxu0 0
        %599 = vmatpush1.bf16.msra.mxu0 0
        %600 = vmatprep.subr.bf16.mxu0 0
        %601 = vmatpush1.bf16.msra.mxu0 0
        %602 = vmatprep.subr.bf16.mxu0 0
        %603 = vmatpush1.bf16.msra.mxu0 0
        %604 = vmatprep.subr.bf16.mxu0 0
        %605 = vmatpush1.bf16.msra.mxu0 0
        %606 = vmatprep.mubr.bf16.mxu0 0
        %607 = vmatmul.mubr.bf16.gmra.mrb[0].mxu0 %v435
        %v608 = vpop.f32.mrb[0].mxu0
        %v609 = vadd.f32 %v346, %v608
        %v610 = vpop.f32.mrb[0].mxu0
        %v611 = vadd.f32 %v346, %v610
        %v612 = vpop.f32.mrb[0].mxu0
        %v613 = vadd.f32 %v351, %v612
        %v614 = vpop.f32.mrb[0].mxu0
        %v615 = vadd.f32 %v351, %v614
        %616 = vmatprep.mubr.bf16.mxu0 0
        %617 = vmatmul.mubr.bf16.gmra.mrb[0].mxu0 %v438
        %v618 = vpop.f32.mrb[0].mxu0
        %v619 = vadd.f32 %v356, %v618
        %v620 = vpop.f32.mrb[0].mxu0
        %v621 = vadd.f32 %v356, %v620
        %v622 = vpop.f32.mrb[0].mxu0
        %v623 = vadd.f32 %v361, %v622
        %v624 = vpop.f32.mrb[0].mxu0
        %v625 = vadd.f32 %v361, %v624
        %626 = vdwg.mxu0
        %627 = vmatprep.subr.bf16.mxu0 %v416
        %628 = vmatpush1.bf16.msra.mxu0 %v415
        %629 = vmatprep.subr.bf16.mxu0 %v466
        %630 = vmatpush1.bf16.msra.mxu0 %v463
        %631 = vmatprep.subr.bf16.mxu0 0
        %632 = vmatpush1.bf16.msra.mxu0 0
        %633 = vmatprep.subr.bf16.mxu0 0
        %634 = vmatpush1.bf16.msra.mxu0 0
        %635 = vmatprep.subr.bf16.mxu0 0
        %636 = vmatpush1.bf16.msra.mxu0 0
        %637 = vmatprep.subr.bf16.mxu0 0
        %638 = vmatpush1.bf16.msra.mxu0 0
        %639 = vmatprep.subr.bf16.mxu0 0
        %640 = vmatpush1.bf16.msra.mxu0 0
        %641 = vmatprep.subr.bf16.mxu0 0
        %642 = vmatpush1.bf16.msra.mxu0 0
        %643 = vmatprep.subr.bf16.mxu0 0
        %644 = vmatpush1.bf16.msra.mxu0 0
        %645 = vmatprep.subr.bf16.mxu0 0
        %646 = vmatpush1.bf16.msra.mxu0 0
        %647 = vmatprep.subr.bf16.mxu0 0
        %648 = vmatpush1.bf16.msra.mxu0 0
        %649 = vmatprep.subr.bf16.mxu0 0
        %650 = vmatpush1.bf16.msra.mxu0 0
        %651 = vmatprep.subr.bf16.mxu0 0
        %652 = vmatpush1.bf16.msra.mxu0 0
        %653 = vmatprep.subr.bf16.mxu0 0
        %654 = vmatpush1.bf16.msra.mxu0 0
        %655 = vmatprep.subr.bf16.mxu0 0
        %656 = vmatpush1.bf16.msra.mxu0 0
        %657 = vmatprep.subr.bf16.mxu0 0
        %658 = vmatpush1.bf16.msra.mxu0 0
        %659 = vmatprep.mubr.bf16.mxu0 0
        %660 = vmatmul.mubr.bf16.gmra.mrb[0].mxu0 %v435
        %v661 = vpop.f32.mrb[0].mxu0
        %v662 = vadd.f32 %v346, %v661
        %v663 = vpop.f32.mrb[0].mxu0
        %v664 = vadd.f32 %v346, %v663
        %v665 = vpop.f32.mrb[0].mxu0
        %v666 = vadd.f32 %v351, %v665
        %v667 = vpop.f32.mrb[0].mxu0
        %v668 = vadd.f32 %v351, %v667
        %669 = vmatprep.mubr.bf16.mxu0 0
        %670 = vmatmul.mubr.bf16.gmra.mrb[0].mxu0 %v438
        %v671 = vpop.f32.mrb[0].mxu0
        %v672 = vadd.f32 %v356, %v671
        %v673 = vpop.f32.mrb[0].mxu0
        %v674 = vadd.f32 %v356, %v673
        %v675 = vpop.f32.mrb[0].mxu0
        %v676 = vadd.f32 %v361, %v675
        %v677 = vpop.f32.mrb[0].mxu0
        %v678 = vadd.f32 %v361, %v677
        %679 = vdwg.mxu0
        %v680 = vmax.f32 %v503, 0.0
        %v681 = vmax.f32 %v505, 0.0
        %v682 = vmax.f32 %v556, 0.0
        %v683 = vmax.f32 %v558, 0.0
        %v684 = vmax.f32 %v609, 0.0
        %v685 = vmax.f32 %v611, 0.0
        %v686 = vmax.f32 %v662, 0.0
        %v687 = vmax.f32 %v664, 0.0
        %v688 = vmax.f32 %v507, 0.0
        %v689 = vmax.f32 %v509, 0.0
        %v690 = vmax.f32 %v560, 0.0
        %v691 = vmax.f32 %v562, 0.0
        %v692 = vmax.f32 %v613, 0.0
        %v693 = vmax.f32 %v615, 0.0
        %v694 = vmax.f32 %v666, 0.0
        %v695 = vmax.f32 %v668, 0.0
        %v696 = vmax.f32 %v513, 0.0
        %v697 = vmax.f32 %v515, 0.0
        %v698 = vmax.f32 %v566, 0.0
        %v699 = vmax.f32 %v568, 0.0
        %v700 = vmax.f32 %v619, 0.0
        %v701 = vmax.f32 %v621, 0.0
        %v702 = vmax.f32 %v672, 0.0
        %v703 = vmax.f32 %v674, 0.0
        %v704 = vmax.f32 %v517, 0.0
        %v705 = vmax.f32 %v519, 0.0
        %v706 = vmax.f32 %v570, 0.0
        %v707 = vmax.f32 %v572, 0.0
        %v708 = vmax.f32 %v623, 0.0
        %v709 = vmax.f32 %v625, 0.0
        %v710 = vmax.f32 %v676, 0.0
        %v711 = vmax.f32 %v678, 0.0
        %v712 = vpack.c.bf16 %v688, %v680
        %v713 = vpack.c.bf16 %v689, %v681
        %v714 = vpack.c.bf16 %v690, %v682
        %v715 = vpack.c.bf16 %v691, %v683
        %v716 = vpack.c.bf16 %v692, %v684
        %v717 = vpack.c.bf16 %v693, %v685
        %v718 = vpack.c.bf16 %v694, %v686
        %v719 = vpack.c.bf16 %v695, %v687
        %v720 = vpack.c.bf16 %v704, %v696
        %v721 = vpack.c.bf16 %v705, %v697
        %v722 = vpack.c.bf16 %v706, %v698
        %v723 = vpack.c.bf16 %v707, %v699
        %v724 = vpack.c.bf16 %v708, %v700
        %v725 = vpack.c.bf16 %v709, %v701
        %v726 = vpack.c.bf16 %v710, %v702
        %v727 = vpack.c.bf16 %v711, %v703
        %v728 = vld [vmem:[%s3] sm:$0xf]
        %v729 = vld [vmem:[%s3 + $0x4] sm:$0xf]
        %v730 = vld [vmem:[%s4] sm:$0xff]
        %v731 = vld [vmem:[%s4 + $0x8] sm:$0xff]
        %733 = vset.pattern.permute.xlu0 0
        %734 = vperm.xlu0 %733, %v730
        %v735 = vpop.permute.xlu0 %734
        %738 = vset.pattern.permute.xlu0 0
        %739 = vperm.xlu0 %738, %v731
        %v740 = vpop.permute.xlu0 %739
        %v744 = vunpack.c.l.b16 %v728
        %v745 = vunpack.c.l.b16 %v729
        %v746 = vpack.c.b16 %v745, %v744
        %vm747 = vcmask 261120
        %v749 = vsel %vm747, %v746, 0
        %751 = vmatprep.subr.bf16.mxu0 %v713
        %752 = vmatpush1.bf16.msra.mxu0 %v712
        %753 = vmatprep.subr.bf16.mxu0 %v721
        %754 = vmatpush1.bf16.msra.mxu0 %v720
        %755 = vmatprep.subr.bf16.mxu0 0
        %756 = vmatpush1.bf16.msra.mxu0 0
        %757 = vmatprep.subr.bf16.mxu0 0
        %758 = vmatpush1.bf16.msra.mxu0 0
        %759 = vmatprep.subr.bf16.mxu0 0
        %760 = vmatpush1.bf16.msra.mxu0 0
        %761 = vmatprep.subr.bf16.mxu0 0
        %762 = vmatpush1.bf16.msra.mxu0 0
        %763 = vmatprep.subr.bf16.mxu0 0
        %764 = vmatpush1.bf16.msra.mxu0 0
        %765 = vmatprep.subr.bf16.mxu0 0
        %766 = vmatpush1.bf16.msra.mxu0 0
        %767 = vmatprep.subr.bf16.mxu0 0
        %768 = vmatpush1.bf16.msra.mxu0 0
        %769 = vmatprep.subr.bf16.mxu0 0
        %770 = vmatpush1.bf16.msra.mxu0 0
        %771 = vmatprep.subr.bf16.mxu0 0
        %772 = vmatpush1.bf16.msra.mxu0 0
        %773 = vmatprep.subr.bf16.mxu0 0
        %774 = vmatpush1.bf16.msra.mxu0 0
        %775 = vmatprep.subr.bf16.mxu0 0
        %776 = vmatpush1.bf16.msra.mxu0 0
        %777 = vmatprep.subr.bf16.mxu0 0
        %778 = vmatpush1.bf16.msra.mxu0 0
        %779 = vmatprep.subr.bf16.mxu0 0
        %780 = vmatpush1.bf16.msra.mxu0 0
        %781 = vmatprep.subr.bf16.mxu0 0
        %782 = vmatpush1.bf16.msra.mxu0 0
        %783 = vmatprep.mubr.bf16.mxu0 0
        %784 = vmatmul.mubr.bf16.gmra.mrb[0].mxu0 %v749
        %v785 = vpop.f32.mrb[0].mxu0
        %v786 = vadd.f32 %v735, %v785
        %v787 = vpop.f32.mrb[0].mxu0
        %v788 = vadd.f32 %v735, %v787
        %v789 = vpop.f32.mrb[0].mxu0
        %v790 = vadd.f32 %v740, %v789
        %v791 = vpop.f32.mrb[0].mxu0
        %v792 = vadd.f32 %v740, %v791
        %793 = vdwg.mxu0
        %794 = vmatprep.subr.bf16.mxu0 %v715
        %795 = vmatpush1.bf16.msra.mxu0 %v714
        %796 = vmatprep.subr.bf16.mxu0 %v723
        %797 = vmatpush1.bf16.msra.mxu0 %v722
        %798 = vmatprep.subr.bf16.mxu0 0
        %799 = vmatpush1.bf16.msra.mxu0 0
        %800 = vmatprep.subr.bf16.mxu0 0
        %801 = vmatpush1.bf16.msra.mxu0 0
        %802 = vmatprep.subr.bf16.mxu0 0
        %803 = vmatpush1.bf16.msra.mxu0 0
        %804 = vmatprep.subr.bf16.mxu0 0
        %805 = vmatpush1.bf16.msra.mxu0 0
        %806 = vmatprep.subr.bf16.mxu0 0
        %807 = vmatpush1.bf16.msra.mxu0 0
        %808 = vmatprep.subr.bf16.mxu0 0
        %809 = vmatpush1.bf16.msra.mxu0 0
        %810 = vmatprep.subr.bf16.mxu0 0
        %811 = vmatpush1.bf16.msra.mxu0 0
        %812 = vmatprep.subr.bf16.mxu0 0
        %813 = vmatpush1.bf16.msra.mxu0 0
        %814 = vmatprep.subr.bf16.mxu0 0
        %815 = vmatpush1.bf16.msra.mxu0 0
        %816 = vmatprep.subr.bf16.mxu0 0
        %817 = vmatpush1.bf16.msra.mxu0 0
        %818 = vmatprep.subr.bf16.mxu0 0
        %819 = vmatpush1.bf16.msra.mxu0 0
        %820 = vmatprep.subr.bf16.mxu0 0
        %821 = vmatpush1.bf16.msra.mxu0 0
        %822 = vmatprep.subr.bf16.mxu0 0
        %823 = vmatpush1.bf16.msra.mxu0 0
        %824 = vmatprep.subr.bf16.mxu0 0
        %825 = vmatpush1.bf16.msra.mxu0 0
        %826 = vmatprep.mubr.bf16.mxu0 0
        %827 = vmatmul.mubr.bf16.gmra.mrb[0].mxu0 %v749
        %v828 = vpop.f32.mrb[0].mxu0
        %v829 = vadd.f32 %v735, %v828
        %v830 = vpop.f32.mrb[0].mxu0
        %v831 = vadd.f32 %v735, %v830
        %v832 = vpop.f32.mrb[0].mxu0
        %v833 = vadd.f32 %v740, %v832
        %v834 = vpop.f32.mrb[0].mxu0
        %v835 = vadd.f32 %v740, %v834
        %836 = vdwg.mxu0
        %837 = vmatprep.subr.bf16.mxu0 %v717
        %838 = vmatpush1.bf16.msra.mxu0 %v716
        %839 = vmatprep.subr.bf16.mxu0 %v725
        %840 = vmatpush1.bf16.msra.mxu0 %v724
        %841 = vmatprep.subr.bf16.mxu0 0
        %842 = vmatpush1.bf16.msra.mxu0 0
        %843 = vmatprep.subr.bf16.mxu0 0
        %844 = vmatpush1.bf16.msra.mxu0 0
        %845 = vmatprep.subr.bf16.mxu0 0
        %846 = vmatpush1.bf16.msra.mxu0 0
        %847 = vmatprep.subr.bf16.mxu0 0
        %848 = vmatpush1.bf16.msra.mxu0 0
        %849 = vmatprep.subr.bf16.mxu0 0
        %850 = vmatpush1.bf16.msra.mxu0 0
        %851 = vmatprep.subr.bf16.mxu0 0
        %852 = vmatpush1.bf16.msra.mxu0 0
        %853 = vmatprep.subr.bf16.mxu0 0
        %854 = vmatpush1.bf16.msra.mxu0 0
        %855 = vmatprep.subr.bf16.mxu0 0
        %856 = vmatpush1.bf16.msra.mxu0 0
        %857 = vmatprep.subr.bf16.mxu0 0
        %858 = vmatpush1.bf16.msra.mxu0 0
        %859 = vmatprep.subr.bf16.mxu0 0
        %860 = vmatpush1.bf16.msra.mxu0 0
        %861 = vmatprep.subr.bf16.mxu0 0
        %862 = vmatpush1.bf16.msra.mxu0 0
        %863 = vmatprep.subr.bf16.mxu0 0
        %864 = vmatpush1.bf16.msra.mxu0 0
        %865 = vmatprep.subr.bf16.mxu0 0
        %866 = vmatpush1.bf16.msra.mxu0 0
        %867 = vmatprep.subr.bf16.mxu0 0
        %868 = vmatpush1.bf16.msra.mxu0 0
        %869 = vmatprep.mubr.bf16.mxu0 0
        %870 = vmatmul.mubr.bf16.gmra.mrb[0].mxu0 %v749
        %v871 = vpop.f32.mrb[0].mxu0
        %v872 = vadd.f32 %v735, %v871
        %v873 = vpop.f32.mrb[0].mxu0
        %v874 = vadd.f32 %v735, %v873
        %v875 = vpop.f32.mrb[0].mxu0
        %v876 = vadd.f32 %v740, %v875
        %v877 = vpop.f32.mrb[0].mxu0
        %v878 = vadd.f32 %v740, %v877
        %879 = vdwg.mxu0
        %880 = vmatprep.subr.bf16.mxu0 %v719
        %881 = vmatpush1.bf16.msra.mxu0 %v718
        %882 = vmatprep.subr.bf16.mxu0 %v727
        %883 = vmatpush1.bf16.msra.mxu0 %v726
        %884 = vmatprep.subr.bf16.mxu0 0
        %885 = vmatpush1.bf16.msra.mxu0 0
        %886 = vmatprep.subr.bf16.mxu0 0
        %887 = vmatpush1.bf16.msra.mxu0 0
        %888 = vmatprep.subr.bf16.mxu0 0
        %889 = vmatpush1.bf16.msra.mxu0 0
        %890 = vmatprep.subr.bf16.mxu0 0
        %891 = vmatpush1.bf16.msra.mxu0 0
        %892 = vmatprep.subr.bf16.mxu0 0
        %893 = vmatpush1.bf16.msra.mxu0 0
        %894 = vmatprep.subr.bf16.mxu0 0
        %895 = vmatpush1.bf16.msra.mxu0 0
        %896 = vmatprep.subr.bf16.mxu0 0
        %897 = vmatpush1.bf16.msra.mxu0 0
        %898 = vmatprep.subr.bf16.mxu0 0
        %899 = vmatpush1.bf16.msra.mxu0 0
        %900 = vmatprep.subr.bf16.mxu0 0
        %901 = vmatpush1.bf16.msra.mxu0 0
        %902 = vmatprep.subr.bf16.mxu0 0
        %903 = vmatpush1.bf16.msra.mxu0 0
        %904 = vmatprep.subr.bf16.mxu0 0
        %905 = vmatpush1.bf16.msra.mxu0 0
        %906 = vmatprep.subr.bf16.mxu0 0
        %907 = vmatpush1.bf16.msra.mxu0 0
        %908 = vmatprep.subr.bf16.mxu0 0
        %909 = vmatpush1.bf16.msra.mxu0 0
        %910 = vmatprep.subr.bf16.mxu0 0
        %911 = vmatpush1.bf16.msra.mxu0 0
        %912 = vmatprep.mubr.bf16.mxu0 0
        %913 = vmatmul.mubr.bf16.gmra.mrb[0].mxu0 %v749
        %v914 = vpop.f32.mrb[0].mxu0
        %v915 = vadd.f32 %v735, %v914
        %v916 = vpop.f32.mrb[0].mxu0
        %v917 = vadd.f32 %v735, %v916
        %v918 = vpop.f32.mrb[0].mxu0
        %v919 = vadd.f32 %v740, %v918
        %v920 = vpop.f32.mrb[0].mxu0
        %v921 = vadd.f32 %v740, %v920
        %922 = vdwg.mxu0
        %v923 = vmax.f32 %v786, 0.0
        %v924 = vmax.f32 %v788, 0.0
        %v925 = vmax.f32 %v829, 0.0
        %v926 = vmax.f32 %v831, 0.0
        %v927 = vmax.f32 %v872, 0.0
        %v928 = vmax.f32 %v874, 0.0
        %v929 = vmax.f32 %v915, 0.0
        %v930 = vmax.f32 %v917, 0.0
        %v931 = vmax.f32 %v790, 0.0
        %v932 = vmax.f32 %v792, 0.0
        %v933 = vmax.f32 %v833, 0.0
        %v934 = vmax.f32 %v835, 0.0
        %v935 = vmax.f32 %v876, 0.0
        %v936 = vmax.f32 %v878, 0.0
        %v937 = vmax.f32 %v919, 0.0
        %v938 = vmax.f32 %v921, 0.0
        %v939 = vld [vmem:[%s5] sm:$0xff]
        %v940 = vld [vmem:[%s5 + $0x8] sm:$0xff]
        %942 = vset.pattern.permute.xlu0 0
        %943 = vperm.xlu0 %942, %v939
        %v944 = vpop.permute.xlu0 %943
        %947 = vset.pattern.permute.xlu0 0
        %948 = vperm.xlu0 %947, %v940
        %v949 = vpop.permute.xlu0 %948
        %v951 = vmul.f32 %v923, %v944
        %v952 = vmul.f32 %v924, %v944
        %v953 = vmul.f32 %v925, %v944
        %v954 = vmul.f32 %v926, %v944
        %v955 = vmul.f32 %v927, %v944
        %v956 = vmul.f32 %v928, %v944
        %v957 = vmul.f32 %v929, %v944
        %v958 = vmul.f32 %v930, %v944
        %v959 = vmul.f32 %v931, %v949
        %v960 = vmul.f32 %v932, %v949
        %v961 = vmul.f32 %v933, %v949
        %v962 = vmul.f32 %v934, %v949
        %v963 = vmul.f32 %v935, %v949
        %v964 = vmul.f32 %v936, %v949
        %v965 = vmul.f32 %v937, %v949
        %v966 = vmul.f32 %v938, %v949
        %v967 = vadd.f32 %v951, %v959
        %v968 = vrot.slane %v967, 4
        %v969 = vadd.f32 %v967, %v968
        %v970 = vrot.slane %v969, 2
        %v971 = vadd.f32 %v969, %v970
        %v972 = vrot.slane %v971, 1
        %v973 = vadd.f32 %v971, %v972
        %v974 = vadd.f32 %v952, %v960
        %v975 = vrot.slane %v974, 4
        %v976 = vadd.f32 %v974, %v975
        %v977 = vrot.slane %v976, 2
        %v978 = vadd.f32 %v976, %v977
        %v979 = vrot.slane %v978, 1
        %v980 = vadd.f32 %v978, %v979
        %v981 = vadd.f32 %v953, %v961
        %v982 = vrot.slane %v981, 4
        %v983 = vadd.f32 %v981, %v982
        %v984 = vrot.slane %v983, 2
        %v985 = vadd.f32 %v983, %v984
        %v986 = vrot.slane %v985, 1
        %v987 = vadd.f32 %v985, %v986
        %v988 = vadd.f32 %v954, %v962
        %v989 = vrot.slane %v988, 4
        %v990 = vadd.f32 %v988, %v989
        %v991 = vrot.slane %v990, 2
        %v992 = vadd.f32 %v990, %v991
        %v993 = vrot.slane %v992, 1
        %v994 = vadd.f32 %v992, %v993
        %v995 = vadd.f32 %v955, %v963
        %v996 = vrot.slane %v995, 4
        %v997 = vadd.f32 %v995, %v996
        %v998 = vrot.slane %v997, 2
        %v999 = vadd.f32 %v997, %v998
        %v1000 = vrot.slane %v999, 1
        %v1001 = vadd.f32 %v999, %v1000
        %v1002 = vadd.f32 %v956, %v964
        %v1003 = vrot.slane %v1002, 4
        %v1004 = vadd.f32 %v1002, %v1003
        %v1005 = vrot.slane %v1004, 2
        %v1006 = vadd.f32 %v1004, %v1005
        %v1007 = vrot.slane %v1006, 1
        %v1008 = vadd.f32 %v1006, %v1007
        %v1009 = vadd.f32 %v957, %v965
        %v1010 = vrot.slane %v1009, 4
        %v1011 = vadd.f32 %v1009, %v1010
        %v1012 = vrot.slane %v1011, 2
        %v1013 = vadd.f32 %v1011, %v1012
        %v1014 = vrot.slane %v1013, 1
        %v1015 = vadd.f32 %v1013, %v1014
        %v1016 = vadd.f32 %v958, %v966
        %v1017 = vrot.slane %v1016, 4
        %v1018 = vadd.f32 %v1016, %v1017
        %v1019 = vrot.slane %v1018, 2
        %v1020 = vadd.f32 %v1018, %v1019
        %v1021 = vrot.slane %v1020, 1
        %v1022 = vadd.f32 %v1020, %v1021
        %s1023 = sld [smem:[#allocation2]]
        %v1024 = vstv %s1023
        %v1025 = vadd.f32 %v973, %v1024
        %v1026 = vadd.f32 %v980, %v1024
        %v1027 = vadd.f32 %v987, %v1024
        %v1028 = vadd.f32 %v994, %v1024
        %v1029 = vadd.f32 %v1001, %v1024
        %v1030 = vadd.f32 %v1008, %v1024
        %v1031 = vadd.f32 %v1015, %v1024
        %v1032 = vadd.f32 %v1022, %v1024
        %v1041 = vcombine.low %v1025, %v1026
        %v1042 = vcombine.low %v1027, %v1028
        %v1043 = vcombine.low %v1029, %v1030
        %v1044 = vcombine.low %v1031, %v1032
        %v1046 = vunpack.c.l.s4 1966171168
        %v1047 = vunpack.c.0.s8 %v1046
        %v1048 = vlaneseq
        %v1049 = vshrl.u32 %v1048, 7
        %v1050 = vsub.s32 %v1047, %v1049
        %v1051 = vrot.slane %v1041, %v1050
        %v1053 = vunpack.c.l.s4 1966171168
        %v1054 = vunpack.c.0.s8 %v1053
        %v1055 = vlaneseq
        %v1056 = vshrl.u32 %v1055, 7
        %v1057 = vsub.s32 %v1054, %v1056
        %v1058 = vrot.slane %v1042, %v1057
        %v1060 = vunpack.c.l.s4 1966171168
        %v1061 = vunpack.c.0.s8 %v1060
        %v1062 = vlaneseq
        %v1063 = vshrl.u32 %v1062, 7
        %v1064 = vsub.s32 %v1061, %v1063
        %v1065 = vrot.slane %v1043, %v1064
        %v1067 = vunpack.c.l.s4 1966171168
        %v1068 = vunpack.c.0.s8 %v1067
        %v1069 = vlaneseq
        %v1070 = vshrl.u32 %v1069, 7
        %v1071 = vsub.s32 %v1068, %v1070
        %v1072 = vrot.slane %v1044, %v1071
        %v1073 = vcombine.low %v1051, %v1058
        %v1074 = vcombine.low %v1065, %v1072
        %v1076 = vunpack.c.l.s4 1966171168
        %v1077 = vunpack.c.0.s8 %v1076
        %v1078 = vlaneseq
        %v1079 = vshrl.u32 %v1078, 7
        %v1080 = vsub.s32 %v1077, %v1079
        %v1081 = vrot.slane %v1073, %v1080
        %v1083 = vunpack.c.l.s4 1966171168
        %v1084 = vunpack.c.0.s8 %v1083
        %v1085 = vlaneseq
        %v1086 = vshrl.u32 %v1085, 7
        %v1087 = vsub.s32 %v1084, %v1086
        %v1088 = vrot.slane %v1074, %v1087
        %v1089 = vcombine.low %v1081, %v1088
        %1091 = vst [vmem:[%s319] sm:$0xff] %v1089
        %s1092 = sand.u32 %s182, 1
        %s1093 = scalar_lea.sflag [#allocation5], %s1092
        %s1094 = sand.u32 %s182, 1
        %s1095 = smul.addr %s1094, 8
        %s1096 = scalar_lea.vmem [#allocation4], %s1095
        // Predicated region
        $region72: #{forward.1} parent=66 // pred_check
          %p1097 = pneg %p192
        $region73: #{forward.1} parent=66 // pred_check_branch
          %1099 = sbr.rel (%p1097) target = $region75
        $region74: #{forward.1} parent=66 // pred_region
          %s1100 = smul.u32 8, %s22
          %s1102 = ssub.s32 128, 128
          %1103 = vsyncadd %s1093, %s1102
          %s1104 = smul.addr %s1100, 16
          %s1105 = scalar_lea.hbm %s7, %s1104
          %s1107 = sshll.u32 %s1096, 4
          %s1108 = int_to_ptr.vmem [resolvable:$true] %s1107
          %1110 = dma.vmem_to_hbm [thread:$0]  %s1108, 128, %s1105, %s1093
        $region75: #{forward.1} parent=66 // pred_fallthru
          _
      $region67: #{forward.1} parent=5 // pred_fallthru
        _
      %p1111 = scmp.le.s32.totalorder 2, %s17
      // Predicated region
      $region76: #{forward.1} parent=5 // pred_check
        %p1112 = pneg %p1111
      $region77: #{forward.1} parent=5 // pred_check_branch
        %1114 = sbr.rel (%p1112) target = $region79
      $region78: #{forward.1} parent=5 // pred_region
        %s1115 = ssub.s32 %s17, 2
        // Predicated region
        $region80: #{forward.1} parent=78 // pred_check
          %p1116 = pneg %p198
        $region81: #{forward.1} parent=78 // pred_check_branch
          %1118 = sbr.rel (%p1116) target = $region83
        $region82: #{forward.1} parent=78 // pred_region
          %s1119 = sand.u32 %s183, 1
          %s1120 = scalar_lea.sflag [#allocation5], %s1119
          %s1121 = sand.u32 %s183, 1
          %s1122 = smul.addr %s1121, 8
          %s1123 = scalar_lea.vmem [#allocation4], %s1122
          %1124 = dma.done %s1120, 128
        $region83: #{forward.1} parent=78 // pred_fallthru
          _
      $region79: #{forward.1} parent=5 // pred_fallthru
        _
    $region6: #{forward.1} parent=1 // loop_footer
      %s21 = sadd.s32 1, %s17
    $region7: #{forward.1} parent=1 // loop_footer_branch
      %16 = sbr.rel target = $region3
    $region8: #{forward.1} parent=1 // loop_exit
      _
    %1125 = vsyncpa [#allocation5], 1
    %s1126 = scalar_lea.sflag [#allocation5], 1
    %1127 = vsyncpa %s1126, 1

</llo_original>
